<compile_context>
chip_gen: v6e
topology: v6e:2x2x1
jax: 0.10.0
libtpu: 0.0.40
codegen_flags: <defaults>
</compile_context>

<pallas_src>
import functools

import jax
import jax.numpy as jnp
from jax import lax
from jax.experimental import pallas as pl
from jax.experimental.pallas import tpu as pltpu


def _ce_kernel(pred_ref, tgt_ref, out_ref, *, n_valid, tile_n, tiles_per_core):
    # pred_ref: (tile_n, C) logits (native dtype, native (N, C) layout) in VMEM
    # tgt_ref : (tile_n, 1) int32 class ids in VMEM
    # out_ref : (1, 1) f32 VMEM output block owned by this core; it is revisited
    #           across the inner ("arbitrary") grid axis, so it doubles as the
    #           running-sum accumulator.
    core = pl.program_id(0)
    step = pl.program_id(1)

    @pl.when(step == 0)
    def _():
        out_ref[...] = jnp.zeros_like(out_ref)

    # Cast to f32 inside the kernel (bf16 stays bf16 over HBM).
    # TODO(synk): on v6e/v7x with large C a bf16 exp path would halve EUP/vreg
    # traffic, but the kernel is HBM-bound so f32 is kept for accuracy.
    logits = pred_ref[...].astype(jnp.float32)                       # (tile_n, C)
    tgt = tgt_ref[...]                                               # (tile_n, 1)

    # Numerically stable log-sum-exp over the class (lane) axis.
    cmax = jnp.max(logits, axis=-1, keepdims=True)                   # (tile_n, 1)
    lse = cmax + jnp.log(jnp.sum(jnp.exp(logits - cmax),
                                 axis=-1, keepdims=True))            # (tile_n, 1)

    # Target-class logit via one-hot compare + select + sum (VPU/XLU only; MXU
    # would gain nothing in an HBM-bound kernel).
    # TODO(synk): out-of-range target ids silently give picked=0 (loss = lse)
    # instead of raising like torch.nn.functional.cross_entropy.
    cls_ids = lax.broadcasted_iota(jnp.int32, logits.shape, 1)       # (tile_n, C)
    picked = jnp.sum(jnp.where(cls_ids == tgt, logits, 0.0),
                     axis=-1, keepdims=True)                         # (tile_n, 1)

    # Mask rows past the true sample count.  Covers (a) the ragged last tile
    # (no wrapper-side padding) and (b) the duplicated, clamped tile a core
    # reads when the tile count does not split evenly across cores.
    tile_idx = core * tiles_per_core + step
    row_ids = tile_idx * tile_n + lax.broadcasted_iota(jnp.int32, (tile_n, 1), 0)
    per_sample = jnp.where(row_ids < n_valid, lse - picked, 0.0)     # (tile_n, 1)

    out_ref[...] += jnp.sum(per_sample, keepdims=True)               # (1, 1)


def _choose_tile_n(n, c, itemsize):
    # Budget ~10 MiB for the two double-buffered input streams.  VMEM blocks are
    # lane-padded to 128, so account for roundup(C, 128) lanes for the logits
    # and 128 lanes for the (tile_n, 1) int32 targets.  10 MiB stays under the
    # smallest scoped-VMEM default (v5e: 16 MiB) even before we raise
    # vmem_limit_bytes, and is far below v7x's 64 MiB physical VMEM per core.
    lanes = ((max(c, 1) + 127) // 128) * 128
    bytes_per_row = lanes * itemsize + 128 * 4
    budget = 10 << 20
    t = budget // (2 * bytes_per_row)
    t = max(512, (t // 512) * 512)
    t = min(t, 32768)
    # Don't allocate far more than the problem needs (keeps tiny-N calls cheap).
    n32 = ((n + 31) // 32) * 32
    return int(min(t, max(32, n32)))


def cross_entropy_loss(pred, target, *, tile_n=None, num_cores=2):
    """F.cross_entropy(pred, target), 'mean' reduction.

    pred: (N, C) float logits (f32/bf16, fed to the kernel in native dtype and
    native layout).  target: (N,) integer class ids.  Returns a f32 scalar.
    """
    n, c = pred.shape
    itemsize = jnp.dtype(pred.dtype).itemsize
    if tile_n is None:
        tile_n = _choose_tile_n(n, c, itemsize)
    tile_n = max(32, (int(tile_n) // 32) * 32)   # sublane-safe for f32/bf16

    n_tiles = -(-n // tile_n)
    tiles_per_core = -(-n_tiles // num_cores)

    # Targets as an (N, 1) int32 column: a free reshape (no transpose, no pad).
    tgt = target.astype(jnp.int32).reshape(n, 1)

    def block_map(ci, ji):
        # Clamp so a core whose tile range runs past the end re-reads a valid
        # tile; the kernel fully masks those rows via the global row index.
        t = jnp.minimum(ci * tiles_per_core + ji, n_tiles - 1)
        return (t, 0)

    kernel = functools.partial(_ce_kernel, n_valid=n, tile_n=tile_n,
                               tiles_per_core=tiles_per_core)

    # VMEM actually needed: both inputs, double-buffered, lane-padded; give the
    # compiler headroom but never ask for more than 32 MiB (safe on all gens).
    lanes = ((c + 127) // 128) * 128
    bytes_needed = 2 * tile_n * (lanes * itemsize + 128 * 4) + (1 << 20)
    vmem_limit = int(min(32 << 20, max(16 << 20, 2 * bytes_needed)))

    cost = pl.CostEstimate(
        flops=5 * n * c,
        transcendentals=n * c + n,
        bytes_accessed=n * c * itemsize + n * 4 + num_cores * 4,
    )

    partials = pl.pallas_call(
        kernel,
        out_shape=jax.ShapeDtypeStruct((num_cores, 1, 1), jnp.float32),
        grid=(num_cores, tiles_per_core),
        in_specs=[
            pl.BlockSpec((tile_n, c), block_map),
            pl.BlockSpec((tile_n, 1), block_map),
        ],
        out_specs=pl.BlockSpec((None, 1, 1), lambda ci, ji: (ci, 0, 0)),
        compiler_params=pltpu.CompilerParams(
            dimension_semantics=("parallel", "arbitrary"),
            vmem_limit_bytes=vmem_limit),
        cost_estimate=cost,
    )(pred, tgt)

    return jnp.sum(partials) / jnp.float32(n)


def cross_entropy_ref(pred, target):
    # Pure-JAX reference (= torch.nn.functional.cross_entropy, mean reduction).
    logp = jax.nn.log_softmax(pred.astype(jnp.float32), axis=-1)
    nll = -jnp.take_along_axis(logp, target[:, None].astype(jnp.int32), axis=-1)
    return jnp.mean(nll)


if __name__ == "__main__":
    key = jax.random.PRNGKey(0)
    k1, k2, k3, k4, k5, k6 = jax.random.split(key, 6)

    # Case 1: PointNet2-style classification logits (batch=16, classes=40).
    N1, C1 = 16, 40
    pred1 = jax.random.normal(k1, (N1, C1), dtype=jnp.float32)
    tgt1 = jax.random.randint(k2, (N1,), 0, C1, dtype=jnp.int32)
    loss1 = cross_entropy_loss(pred1, tgt1)
    jax.block_until_ready(loss1)
    ref1 = cross_entropy_ref(pred1, tgt1)
    assert jnp.allclose(loss1, ref1, rtol=1e-5, atol=1e-5), (loss1, ref1)

    # Case 2: ragged batch + multi-tile grid with uneven core split (exercises
    # cross-tile accumulation, tail masking and clamped duplicate tiles).
    N2, C2 = 300, 13
    pred2 = jax.random.normal(k3, (N2, C2), dtype=jnp.float32)
    tgt2 = jax.random.randint(k4, (N2,), 0, C2, dtype=jnp.int32)
    loss2 = cross_entropy_loss(pred2, tgt2, tile_n=128)
    jax.block_until_ready(loss2)
    ref2 = cross_entropy_ref(pred2, tgt2)
    assert jnp.allclose(loss2, ref2, rtol=1e-5, atol=1e-5), (loss2, ref2)

    # Case 3: native bf16 logits fed straight to the kernel (no host-side cast).
    N3, C3 = 64, 40
    pred3 = jax.random.normal(k5, (N3, C3), dtype=jnp.bfloat16)
    tgt3 = jax.random.randint(k6, (N3,), 0, C3, dtype=jnp.int32)
    loss3 = cross_entropy_loss(pred3, tgt3)
    jax.block_until_ready(loss3)
    ref3 = cross_entropy_ref(pred3, tgt3)
    assert jnp.allclose(loss3, ref3, rtol=1e-4, atol=1e-4), (loss3, ref3)

    print("KERNEL_OK")
</pallas_src>

<mosaic_0001>
module attributes {stable_mosaic.version = 11 : i64} {
  func.func @_ce_kernel(%arg0: i32, %arg1: i32, %arg2: memref<32x40xf32, #tpu.memory_space<vmem>>, %arg3: memref<32x1xi32, #tpu.memory_space<vmem>>, %arg4: memref<1x1x1xf32, #tpu.memory_space<vmem>>) attributes {dimension_semantics = [#tpu.dimension_semantics<parallel>, #tpu.dimension_semantics<arbitrary>], iteration_bounds = array<i64: 2, 1>, scalar_prefetch = 0 : i64, scratch_operands = 0 : i64, tpu.core_type = #tpu.core_type<tc>, window_params = [{transform_indices = @transform_0, window_bounds = array<i64: 32, 40>}, {transform_indices = @transform_1, window_bounds = array<i64: 32, 1>}, {transform_indices = @transform_2, window_bounds = array<i64: 1, 1, 1>}]} {
    %c0_i32 = arith.constant 0 : i32
    %0 = arith.cmpi eq, %arg1, %c0_i32 : i32
    %1 = arith.extui %0 : i1 to i32
    %c0_i32_0 = arith.constant 0 : i32
    %2 = arith.cmpi ne, %1, %c0_i32_0 : i32
    scf.if %2 {
      %cst_15 = arith.constant 0.000000e+00 : f32
      %43 = vector.broadcast %cst_15 : f32 to vector<1x1xf32>
      %c0_16 = arith.constant 0 : index
      %c0_17 = arith.constant 0 : index
      %c0_18 = arith.constant 0 : index
      %44 = vector.load %arg4[%c0_16, %c0_17, %c0_18] : memref<1x1x1xf32, #tpu.memory_space<vmem>>, vector<1x1x1xf32>
      %45 = vector.shape_cast %44 : vector<1x1x1xf32> to vector<1x1xf32>
      %46 = vector.shape_cast %43 : vector<1x1xf32> to vector<1x1x1xf32>
      tpu.vector_store %arg4[%c0_16, %c0_17, %c0_18], %46 {strides = array<i32>} : memref<1x1x1xf32, #tpu.memory_space<vmem>>, vector<1x1x1xf32>,
    } else {
    }
    %c0 = arith.constant 0 : index
    %c0_1 = arith.constant 0 : index
    %3 = vector.load %arg2[%c0, %c0_1] : memref<32x40xf32, #tpu.memory_space<vmem>>, vector<32x40xf32>
    %c0_2 = arith.constant 0 : index
    %c0_3 = arith.constant 0 : index
    %4 = vector.load %arg3[%c0_2, %c0_3] : memref<32x1xi32, #tpu.memory_space<vmem>>, vector<32x1xi32>
    %cst = arith.constant dense<0xFF800000> : vector<32xf32>
    %5 = vector.multi_reduction <maximumf>, %3, %cst [1] : vector<32x40xf32> to vector<32xf32>
    %6 = vector.shape_cast %5 : vector<32xf32> to vector<32x1xf32>
    %7 = vector.broadcast %6 : vector<32x1xf32> to vector<32x40xf32>
    %8 = arith.subf %3, %7 : vector<32x40xf32>
    %9 = math.exp %8 : vector<32x40xf32>
    %cst_4 = arith.constant dense<0.000000e+00> : vector<32xf32>
    %10 = vector.multi_reduction <add>, %9, %cst_4 [1] : vector<32x40xf32> to vector<32xf32>
    %11 = vector.shape_cast %10 : vector<32xf32> to vector<32x1xf32>
    %12 = math.log %11 : vector<32x1xf32>
    %13 = arith.addf %6, %12 : vector<32x1xf32>
    %14 = tpu.iota {dimensions = array<i32: 1>} : vector<32x40xi32>
    %15 = vector.broadcast %4 : vector<32x1xi32> to vector<32x40xi32>
    %16 = arith.cmpi eq, %14, %15 : vector<32x40xi32>
    %cst_5 = arith.constant 0.000000e+00 : f32
    %17 = vector.broadcast %cst_5 : f32 to vector<32x40xf32>
    %18 = arith.select %16, %3, %17 : vector<32x40xi1>, vector<32x40xf32>
    %cst_6 = arith.constant dense<0.000000e+00> : vector<32xf32>
    %19 = vector.multi_reduction <add>, %18, %cst_6 [1] : vector<32x40xf32> to vector<32xf32>
    %20 = vector.shape_cast %19 : vector<32xf32> to vector<32x1xf32>
    %c1_i32 = arith.constant 1 : i32
    %21 = arith.muli %arg0, %c1_i32 : i32
    %22 = arith.addi %21, %arg1 : i32
    %c32_i32 = arith.constant 32 : i32
    %23 = arith.muli %22, %c32_i32 : i32
    %24 = tpu.iota {dimensions = array<i32: 0>} : vector<32x1xi32>
    %25 = vector.broadcast %23 : i32 to vector<32x1xi32>
    %26 = arith.addi %25, %24 : vector<32x1xi32>
    %c16_i32 = arith.constant 16 : i32
    %27 = vector.broadcast %c16_i32 : i32 to vector<32x1xi32>
    %28 = arith.cmpi slt, %26, %27 : vector<32x1xi32>
    %29 = arith.subf %13, %20 : vector<32x1xf32>
    %cst_7 = arith.constant 0.000000e+00 : f32
    %30 = vector.broadcast %cst_7 : f32 to vector<32x1xf32>
    %31 = arith.select %28, %29, %30 : vector<32x1xi1>, vector<32x1xf32>
    %c0_8 = arith.constant 0 : index
    %c0_9 = arith.constant 0 : index
    %c0_10 = arith.constant 0 : index
    %32 = vector.load %arg4[%c0_8, %c0_9, %c0_10] : memref<1x1x1xf32, #tpu.memory_space<vmem>>, vector<1x1x1xf32>
    %33 = vector.shape_cast %32 : vector<1x1x1xf32> to vector<1x1xf32>
    %34 = vector.shape_cast %31 : vector<32x1xf32> to vector<1x32x1xf32>
    %cst_11 = arith.constant dense<0.000000e+00> : vector<1xf32>
    %35 = vector.multi_reduction <add>, %34, %cst_11 [1, 2] : vector<1x32x1xf32> to vector<1xf32>
    %36 = vector.shape_cast %35 : vector<1xf32> to vector<1x1x1xf32>
    %37 = vector.extract %36[0, 0, 0] : f32 from vector<1x1x1xf32>
    %38 = vector.broadcast %37 : f32 to vector<1x1xf32>
    %39 = arith.addf %33, %38 : vector<1x1xf32>
    %c0_12 = arith.constant 0 : index
    %c0_13 = arith.constant 0 : index
    %c0_14 = arith.constant 0 : index
    %40 = vector.load %arg4[%c0_12, %c0_13, %c0_14] : memref<1x1x1xf32, #tpu.memory_space<vmem>>, vector<1x1x1xf32>
    %41 = vector.shape_cast %40 : vector<1x1x1xf32> to vector<1x1xf32>
    %42 = vector.shape_cast %39 : vector<1x1xf32> to vector<1x1x1xf32>
    tpu.vector_store %arg4[%c0_12, %c0_13, %c0_14], %42 {strides = array<i32>} : memref<1x1x1xf32, #tpu.memory_space<vmem>>, vector<1x1x1xf32>,
    return
  }
  func.func @transform_0(%arg0: i32, %arg1: i32) -> (i32, i32) {
    %c1_i32 = arith.constant 1 : i32
    %0 = arith.muli %arg0, %c1_i32 : i32
    %1 = arith.addi %0, %arg1 : i32
    %c0_i32 = arith.constant 0 : i32
    %2 = arith.minsi %1, %c0_i32 : i32
    %c0_i32_0 = arith.constant 0 : i32
    %c0_i32_1 = arith.constant 0 : i32
    return %2, %c0_i32_0 : i32, i32
  }
  func.func @transform_1(%arg0: i32, %arg1: i32) -> (i32, i32) {
    %c1_i32 = arith.constant 1 : i32
    %0 = arith.muli %arg0, %c1_i32 : i32
    %1 = arith.addi %0, %arg1 : i32
    %c0_i32 = arith.constant 0 : i32
    %2 = arith.minsi %1, %c0_i32 : i32
    %c0_i32_0 = arith.constant 0 : i32
    %c0_i32_1 = arith.constant 0 : i32
    return %2, %c0_i32_0 : i32, i32
  }
  func.func @transform_2(%arg0: i32, %arg1: i32) -> (i32, i32, i32) {
    %c0_i32 = arith.constant 0 : i32
    %c0_i32_0 = arith.constant 0 : i32
    %c0_i32_1 = arith.constant 0 : i32
    return %arg0, %c0_i32, %c0_i32_0 : i32, i32, i32
  }
}

</mosaic_0001>

<llo_original>
// kernel: tpu_custom_call.1
$region0: #{tpu_custom_call.1}
  #allocation0 [shape = 'u32[]', space=smem, size = 0x4, offset = 0x4, fixed_abs, tag = 'smem constant byte address 0x4 - core index']
  #allocation1 [shape = 'u32[144,128]{1,0:T(1,128)}', space=vmem, size = 0x12000, scoped, tag = 'internal scratch']
  %s0 = inlined_call_operand.vmem [shape: f32[16,40], index: 0, kind: input, shape index: {}]
  %s1 = inlined_call_operand.vmem [shape: s32[16,1], index: 1, kind: input, shape index: {}]
  %s2 = inlined_call_operand.vmem [shape: f32[2,1,1], index: 2, kind: output, shape index: {}]
  %s3 = sld [smem:[#allocation0]]
  $region45: #{tpu_custom_call.1} parent=0
    _
  %s5 = ssub.s32 1, %s3
  %s6 = scalar_select 0, %s5, %s3
  loop: start=0, step=1, limit=4
  $region2: #{tpu_custom_call.1} parent=0 // loop_pre_header
    _
  $region3: #{tpu_custom_call.1} parent=0 // loop_header
    %s8 = sphi 0, %s12
    %p9 = scmp.ge.s32.totalorder %s8, 4
    %s15 = sphi 0, %s27
    %s16 = sphi 0, %s23
    %s17 = sphi 0, %s15
    %s18 = sphi 0, %s16
    %s19 = sphi 0, %s17
    %s20 = sphi 0, %s18
    %s36 = sphi 0, %s38
    %s39 = sphi 0, %s36
    %s40 = sphi 0, %s39
    %s56 = sphi 0, %s40
    %s68 = sphi 0, %s70
    %s71 = sphi 0, %s68
    %s72 = sphi 0, %s71
    %s88 = sphi 0, %s72
    %s94 = sphi 0, %s96
    %s97 = sphi 0, %s94
    %s98 = sphi 0, %s97
    %s114 = sphi 0, %s98
  $region4: #{tpu_custom_call.1} parent=0 // loop_header_branch
    %11 = sbr.rel (%p9) target = $region8
  $region5: #{tpu_custom_call.1} parent=0 // loop_body
    %s13 = ssub.s32 %s8, 1
    %s14 = ssub.s32 %s8, 2
    %s21 = sadd.s32 1, %s16
    %p22 = scmp.ge.s32.totalorder %s21, 1
    %s23 = scalar_select %p22, 0, %s21
    %s24 = sadd.s32 1, %s15
    %s25 = scalar_select %p22, %s24, %s15
    %p26 = scmp.ge.s32.totalorder %s25, 2
    %s27 = scalar_select %p26, 0, %s25
    %s28 = sadd.s32 %s15, %s16
    %p29 = scmp.lt.s32.totalorder %s28, 0
    %s30 = scalar_select %p29, %s28, 0
    %s31 = sadd.s32 %s27, %s23
    %p32 = scmp.lt.s32.totalorder %s31, 0
    %s33 = scalar_select %p32, %s31, 0
    %s34 = ssub.s32 %s30, %s33
    %p35 = scmp.eq.s32.totalorder %s34, 0
    %s37 = sadd.s32 %s36, 1
    %s38 = scalar_select %p35, %s36, %s37
    %p41 = pneg %p35
    %p42 = scmp.eq.s32.totalorder %s8, 1
    %p43 = por %p41, %p42
    %p44 = scmp.ne.s32.totalorder %s36, %s39
    %p45 = scmp.eq.s32.totalorder %s8, 0
    %p46 = por %p44, %p45
    %p47 = scmp.ne.s32.totalorder %s36, %s39
    %p48 = scmp.eq.s32.totalorder %s13, 1
    %p49 = por %p47, %p48
    %p50 = scmp.ne.s32.totalorder %s39, %s40
    %p51 = scmp.eq.s32.totalorder %s13, 0
    %p52 = por %p50, %p51
    %p53 = scmp.ne.s32.totalorder %s39, %s40
    %p54 = scmp.eq.s32.totalorder %s14, 1
    %p55 = por %p53, %p54
    %p57 = scmp.ne.s32.totalorder %s40, %s56
    %p58 = scmp.eq.s32.totalorder %s14, 0
    %p59 = por %p57, %p58
    %s60 = sadd.s32 %s15, %s16
    %p61 = scmp.lt.s32.totalorder %s60, 0
    %s62 = scalar_select %p61, %s60, 0
    %s63 = sadd.s32 %s27, %s23
    %p64 = scmp.lt.s32.totalorder %s63, 0
    %s65 = scalar_select %p64, %s63, 0
    %s66 = ssub.s32 %s62, %s65
    %p67 = scmp.eq.s32.totalorder %s66, 0
    %s69 = sadd.s32 %s68, 1
    %s70 = scalar_select %p67, %s68, %s69
    %p73 = pneg %p67
    %p74 = scmp.eq.s32.totalorder %s8, 1
    %p75 = por %p73, %p74
    %p76 = scmp.ne.s32.totalorder %s68, %s71
    %p77 = scmp.eq.s32.totalorder %s8, 0
    %p78 = por %p76, %p77
    %p79 = scmp.ne.s32.totalorder %s68, %s71
    %p80 = scmp.eq.s32.totalorder %s13, 1
    %p81 = por %p79, %p80
    %p82 = scmp.ne.s32.totalorder %s71, %s72
    %p83 = scmp.eq.s32.totalorder %s13, 0
    %p84 = por %p82, %p83
    %p85 = scmp.ne.s32.totalorder %s71, %s72
    %p86 = scmp.eq.s32.totalorder %s14, 1
    %p87 = por %p85, %p86
    %p89 = scmp.ne.s32.totalorder %s72, %s88
    %p90 = scmp.eq.s32.totalorder %s14, 0
    %p91 = por %p89, %p90
    %s92 = ssub.s32 %s15, %s27
    %p93 = scmp.eq.s32.totalorder %s92, 0
    %s95 = sadd.s32 %s94, 1
    %s96 = scalar_select %p93, %s94, %s95
    %p99 = pneg %p93
    %p100 = scmp.eq.s32.totalorder %s8, 1
    %p101 = por %p99, %p100
    %p102 = scmp.ne.s32.totalorder %s94, %s97
    %p103 = scmp.eq.s32.totalorder %s8, 0
    %p104 = por %p102, %p103
    %p105 = scmp.ne.s32.totalorder %s94, %s97
    %p106 = scmp.eq.s32.totalorder %s13, 1
    %p107 = por %p105, %p106
    %p108 = scmp.ne.s32.totalorder %s97, %s98
    %p109 = scmp.eq.s32.totalorder %s13, 0
    %p110 = por %p108, %p109
    %p111 = scmp.ne.s32.totalorder %s97, %s98
    %p112 = scmp.eq.s32.totalorder %s14, 1
    %p113 = por %p111, %p112
    %p115 = scmp.ne.s32.totalorder %s98, %s114
    %p116 = scmp.eq.s32.totalorder %s14, 0
    %p117 = por %p115, %p116
    %p118 = scmp.le.s32.totalorder 1, %s8
    %p119 = scmp.lt.s32.totalorder %s8, 3
    %p120 = pnand %p118, %p119
    %p121 = pneg %p120
    // Predicated region
    $region9: #{tpu_custom_call.1} parent=5 // pred_check
      _
    $region10: #{tpu_custom_call.1} parent=5 // pred_check_branch
      %123 = sbr.rel (%p120) target = $region12
    $region11: #{tpu_custom_call.1} parent=5 // pred_region
      %s124 = ssub.s32 %s8, 1
    $region12: #{tpu_custom_call.1} parent=5 // pred_fallthru
      _
    %p125 = scmp.lt.s32.totalorder %s8, 2
    // Predicated region
    $region13: #{tpu_custom_call.1} parent=5 // pred_check
      %p126 = pneg %p125
    $region14: #{tpu_custom_call.1} parent=5 // pred_check_branch
      %128 = sbr.rel (%p126) target = $region16
    $region15: #{tpu_custom_call.1} parent=5 // pred_region
      // Predicated region
      $region17: #{tpu_custom_call.1} parent=15 // pred_check
        %p129 = pneg %p46
      $region18: #{tpu_custom_call.1} parent=15 // pred_check_branch
        %131 = sbr.rel (%p129) target = $region20
      $region19: #{tpu_custom_call.1} parent=15 // pred_region
        %s132 = sadd.s32 %s15, %s16
        %p133 = scmp.lt.s32.totalorder %s132, 0
        %s134 = scalar_select %p133, %s132, 0
        %s135 = smul.u32 4, %s134
        %s136 = ssub.s32 2, %s135
        %s137 = smul.u32 128, %s136
        %p138 = scmp.lt.s32.totalorder %s135, 1
        %s139 = scalar_select %p138, %s135, 1
        %s140 = smul.addr %s139, 8
        %s141 = scalar_lea.vmem %s0, %s140
        %s142 = sadd.s32 %s15, %s16
        %p143 = scmp.lt.s32.totalorder %s142, 0
        %s144 = scalar_select %p143, %s142, 0
        %s145 = smul.u32 4, %s144
        %s146 = ssub.s32 2, %s145
        %s147 = smul.u32 128, %s146
      $region20: #{tpu_custom_call.1} parent=15 // pred_fallthru
        _
      // Predicated region
      $region21: #{tpu_custom_call.1} parent=15 // pred_check
        %p148 = pneg %p78
      $region22: #{tpu_custom_call.1} parent=15 // pred_check_branch
        %150 = sbr.rel (%p148) target = $region24
      $region23: #{tpu_custom_call.1} parent=15 // pred_region
        %s151 = sadd.s32 %s15, %s16
        %p152 = scmp.lt.s32.totalorder %s151, 0
        %s153 = scalar_select %p152, %s151, 0
        %s154 = smul.u32 4, %s153
        %s155 = ssub.s32 2, %s154
        %s156 = smul.u32 128, %s155
        %p157 = scmp.lt.s32.totalorder %s154, 1
        %s158 = scalar_select %p157, %s154, 1
        %s159 = smul.addr %s158, 8
        %s160 = scalar_lea.vmem %s1, %s159
        %s161 = sadd.s32 %s15, %s16
        %p162 = scmp.lt.s32.totalorder %s161, 0
        %s163 = scalar_select %p162, %s161, 0
        %s164 = smul.u32 4, %s163
        %s165 = ssub.s32 2, %s164
        %s166 = smul.u32 128, %s165
      $region24: #{tpu_custom_call.1} parent=15 // pred_fallthru
        _
    $region16: #{tpu_custom_call.1} parent=5 // pred_fallthru
      _
    %p167 = scmp.le.s32.totalorder 1, %s8
    %p168 = scmp.lt.s32.totalorder %s8, 3
    %p169 = pnand %p167, %p168
    %p170 = pneg %p169
    // Predicated region
    $region25: #{tpu_custom_call.1} parent=5 // pred_check
      _
    $region26: #{tpu_custom_call.1} parent=5 // pred_check_branch
      %172 = sbr.rel (%p169) target = $region28
    $region27: #{tpu_custom_call.1} parent=5 // pred_region
      %s173 = ssub.s32 %s8, 1
      %s174 = sadd.s32 %s17, %s18
      %p175 = scmp.lt.s32.totalorder %s174, 0
      %s176 = scalar_select %p175, %s174, 0
      %s177 = smul.u32 4, %s176
      %s178 = ssub.s32 2, %s177
      %s179 = smul.u32 128, %s178
      %p180 = scmp.lt.s32.totalorder %s177, 1
      %s181 = scalar_select %p180, %s177, 1
      %s182 = smul.addr %s181, 8
      %s183 = scalar_lea.vmem %s0, %s182
      %p184 = pneg %p52
      %p185 = pneg %p49
      %s186 = sadd.s32 %s17, %s18
      %p187 = scmp.lt.s32.totalorder %s186, 0
      %s188 = scalar_select %p187, %s186, 0
      %s189 = smul.u32 4, %s188
      %s190 = ssub.s32 2, %s189
      %s191 = smul.u32 128, %s190
      %p192 = scmp.lt.s32.totalorder %s189, 1
      %s193 = scalar_select %p192, %s189, 1
      %s194 = smul.addr %s193, 8
      %s195 = scalar_lea.vmem %s1, %s194
      %p196 = pneg %p84
      %p197 = pneg %p81
      %p198 = pneg %p110
      %p199 = pneg %p107
      %p200 = scmp.lt.s32.totalorder %s17, 1
      %s201 = scalar_select %p200, %s17, 1
      %s202 = scalar_lea.vmem %s2, %s201
      %s203 = sadd.s32 %s17, %s18
      %p204 = scmp.lt.s32.totalorder %s203, 0
      %s205 = scalar_select %p204, %s203, 0
      %s206 = smul.u32 4, %s205
      %s207 = ssub.s32 2, %s206
      %s208 = smul.u32 128, %s207
      %p209 = scmp.lt.s32.totalorder %s206, 1
      %s210 = scalar_select %p209, %s206, 1
      %s211 = smul.addr %s210, 8
      %s212 = scalar_lea.vmem %s0, %s211
      %s213 = sadd.s32 %s17, %s18
      %p214 = scmp.lt.s32.totalorder %s213, 0
      %s215 = scalar_select %p214, %s213, 0
      %s216 = smul.u32 4, %s215
      %s217 = ssub.s32 2, %s216
      %s218 = smul.u32 128, %s217
      %s219 = sadd.s32 %s17, %s18
      %p220 = scmp.lt.s32.totalorder %s219, 0
      %s221 = scalar_select %p220, %s219, 0
      %s222 = smul.u32 4, %s221
      %s223 = ssub.s32 2, %s222
      %s224 = smul.u32 128, %s223
      %p225 = scmp.lt.s32.totalorder %s222, 1
      %s226 = scalar_select %p225, %s222, 1
      %s227 = smul.addr %s226, 8
      %s228 = scalar_lea.vmem %s1, %s227
      %s229 = sadd.s32 %s17, %s18
      %p230 = scmp.lt.s32.totalorder %s229, 0
      %s231 = scalar_select %p230, %s229, 0
      %s232 = smul.u32 4, %s231
      %s233 = ssub.s32 2, %s232
      %s234 = smul.u32 128, %s233
      %p235 = scmp.lt.s32.totalorder %s17, 1
      %s236 = scalar_select %p235, %s17, 1
      %s237 = scalar_lea.vmem %s2, %s236
      %p238 = scmp.eq.s32.totalorder %s18, 0
      // Predicated region
      $region29: #{tpu_custom_call.1} parent=27 // pred_check
        %p239 = pneg %p238
      $region30: #{tpu_custom_call.1} parent=27 // pred_check_branch
        %241 = sbr.rel (%p239) target = $region32
      $region31: #{tpu_custom_call.1} parent=27 // pred_region
        %vm242 = vcmask 0
        %243 = vst.msk [vmem:[%s237] sm:$0x1] %vm242, 0.0
      $region32: #{tpu_custom_call.1} parent=27 // pred_fallthru
        _
      %v244 = vld [vmem:[%s212] sm:$0xff]
      %v245 = vld [vmem:[%s212 + $0x8] sm:$0xff]
      %v246 = vld [vmem:[%s212 + $0x10] sm:$0xff]
      %v247 = vld [vmem:[%s212 + $0x18] sm:$0xff]
      %v248 = vld [vmem:[%s228] sm:$0xff]
      %v249 = vld [vmem:[%s228 + $0x8] sm:$0xff]
      %v250 = vld [vmem:[%s228 + $0x10] sm:$0xff]
      %v251 = vld [vmem:[%s228 + $0x18] sm:$0xff]
      %vm252 = vcmask 326656
      %v253 = vsel %vm252, %v244, -inf
      %254 = vmax.xlane.f32.xlu0 %v253
      %v255 = vpop.xlane.xlu0 %254
      %v256 = vsel %vm252, %v245, -inf
      %257 = vmax.xlane.f32.xlu0 %v256
      %v258 = vpop.xlane.xlu0 %257
      %v259 = vsel %vm252, %v246, -inf
      %260 = vmax.xlane.f32.xlu0 %v259
      %v261 = vpop.xlane.xlu0 %260
      %v262 = vsel %vm252, %v247, -inf
      %263 = vmax.xlane.f32.xlu0 %v262
      %v264 = vpop.xlane.xlu0 %263
      %v265 = vsub.f32 %v244, %v255
      %v266 = vsub.f32 %v245, %v258
      %v267 = vsub.f32 %v246, %v261
      %v268 = vsub.f32 %v247, %v264
      %v269 = vmul.f32 %v265, 1.442695
      %v270 = vpow.pop %v269
      %v271 = vmul.f32 %v266, 1.442695
      %v272 = vpow.pop %v271
      %v273 = vmul.f32 %v267, 1.442695
      %v274 = vpow.pop %v273
      %v275 = vmul.f32 %v268, 1.442695
      %v276 = vpow.pop %v275
      %v277 = vsel %vm252, %v270, 0.0
      %278 = vadd.xlane.f32.xlu0 %v277
      %v279 = vpop.xlane.xlu0 %278
      %v280 = vsel %vm252, %v272, 0.0
      %281 = vadd.xlane.f32.xlu0 %v280
      %v282 = vpop.xlane.xlu0 %281
      %v283 = vsel %vm252, %v274, 0.0
      %284 = vadd.xlane.f32.xlu0 %v283
      %v285 = vpop.xlane.xlu0 %284
      %v286 = vsel %vm252, %v276, 0.0
      %287 = vadd.xlane.f32.xlu0 %v286
      %v288 = vpop.xlane.xlu0 %287
      %v289 = vlog2.pop %v279
      %v290 = vmul.f32 %v289, 0.6931472
      %v291 = vlog2.pop %v282
      %v292 = vmul.f32 %v291, 0.6931472
      %v293 = vlog2.pop %v285
      %v294 = vmul.f32 %v293, 0.6931472
      %v295 = vlog2.pop %v288
      %v296 = vmul.f32 %v295, 0.6931472
      %v297 = vadd.f32 %v255, %v290
      %v298 = vadd.f32 %v258, %v292
      %v299 = vadd.f32 %v261, %v294
      %v300 = vadd.f32 %v264, %v296
      %v301 = vlaneseq
      %v302 = vand.u32 %v301, 127
      %303 = vset.pattern.permute.xlu0 0
      %304 = vperm.xlu0 %303, %v248
      %v305 = vpop.permute.xlu0 %304
      %306 = vset.pattern.permute.xlu0 0
      %307 = vperm.xlu0 %306, %v249
      %v308 = vpop.permute.xlu0 %307
      %309 = vset.pattern.permute.xlu0 0
      %310 = vperm.xlu0 %309, %v250
      %v311 = vpop.permute.xlu0 %310
      %312 = vset.pattern.permute.xlu0 0
      %313 = vperm.xlu0 %312, %v251
      %v314 = vpop.permute.xlu0 %313
      %vm315 = vcmp.eq.s32.totalorder %v302, %v305
      %vm316 = vcmp.eq.s32.totalorder %v302, %v308
      %vm317 = vcmp.eq.s32.totalorder %v302, %v311
      %vm318 = vcmp.eq.s32.totalorder %v302, %v314
      %v319 = vsel %vm315, %v244, 0.0
      %v320 = vsel %vm316, %v245, 0.0
      %v321 = vsel %vm317, %v246, 0.0
      %v322 = vsel %vm318, %v247, 0.0
      %v323 = vsel %vm252, %v319, 0.0
      %324 = vadd.xlane.f32.xlu0 %v323
      %v325 = vpop.xlane.xlu0 %324
      %v326 = vsel %vm252, %v320, 0.0
      %327 = vadd.xlane.f32.xlu0 %v326
      %v328 = vpop.xlane.xlu0 %327
      %v329 = vsel %vm252, %v321, 0.0
      %330 = vadd.xlane.f32.xlu0 %v329
      %v331 = vpop.xlane.xlu0 %330
      %v332 = vsel %vm252, %v322, 0.0
      %333 = vadd.xlane.f32.xlu0 %v332
      %v334 = vpop.xlane.xlu0 %333
      %s335 = sadd.s32 %s17, %s18
      %s336 = smul.u32 %s335, 32
      %v337 = vlaneseq
      %v338 = vshrl.u32 %v337, 7
      %v339 = vadd.s32 %v338, 8
      %v340 = vadd.s32 %v338, 16
      %v341 = vadd.s32 %v338, 24
      %v342 = vstv %s336
      %v343 = vadd.s32 %v342, %v338
      %v344 = vadd.s32 %v342, %v339
      %v345 = vadd.s32 %v342, %v340
      %v346 = vadd.s32 %v342, %v341
      %vm347 = vcmp.lt.s32.totalorder %v343, 16
      %vm348 = vcmp.lt.s32.totalorder %v344, 16
      %vm349 = vcmp.lt.s32.totalorder %v345, 16
      %vm350 = vcmp.lt.s32.totalorder %v346, 16
      %v351 = vsub.f32 %v297, %v325
      %v352 = vsub.f32 %v298, %v328
      %v353 = vsub.f32 %v299, %v331
      %v354 = vsub.f32 %v300, %v334
      %v355 = vsel %vm347, %v351, 0.0
      %v356 = vsel %vm348, %v352, 0.0
      %v357 = vsel %vm349, %v353, 0.0
      %v358 = vsel %vm350, %v354, 0.0
      %v359 = vld [vmem:[%s237] sm:$0x1]
      %vm360 = vcmask 7168
      %v361 = vsel %vm360, %v355, 0.0
      %v362 = vsel %vm360, %v356, 0.0
      %v363 = vadd.f32 %v361, %v362
      %v364 = vsel %vm360, %v357, 0.0
      %v365 = vadd.f32 %v363, %v364
      %v366 = vsel %vm360, %v358, 0.0
      %v367 = vadd.f32 %v365, %v366
      %368 = vadd.xlane.f32.xlu0 %v367
      %v369 = vpop.xlane.xlu0 %368
      %v370 = vrot.slane %v369, 4
      %v371 = vadd.f32 %v369, %v370
      %v372 = vrot.slane %v371, 2
      %v373 = vadd.f32 %v371, %v372
      %v374 = vrot.slane %v373, 1
      %v375 = vadd.f32 %v373, %v374
      %s376 = vtos %v375
      %v377 = vstv %s376
      %v378 = vadd.f32 %v359, %v377
      %vm379 = vcmask 0
      %380 = vst.msk [vmem:[%s237] sm:$0x1] %vm379, %v378
      %p381 = scmp.lt.s32.totalorder %s17, 1
      %s382 = scalar_select %p381, %s17, 1
      %s383 = scalar_lea.vmem %s2, %s382
      // Predicated region
      $region33: #{tpu_custom_call.1} parent=27 // pred_check
        %p384 = pneg %p107
      $region34: #{tpu_custom_call.1} parent=27 // pred_check_branch
        %386 = sbr.rel (%p384) target = $region36
      $region35: #{tpu_custom_call.1} parent=27 // pred_region
        _
      $region36: #{tpu_custom_call.1} parent=27 // pred_fallthru
        _
    $region28: #{tpu_custom_call.1} parent=5 // pred_fallthru
      _
    %p387 = scmp.le.s32.totalorder 2, %s8
    // Predicated region
    $region37: #{tpu_custom_call.1} parent=5 // pred_check
      %p388 = pneg %p387
    $region38: #{tpu_custom_call.1} parent=5 // pred_check_branch
      %390 = sbr.rel (%p388) target = $region40
    $region39: #{tpu_custom_call.1} parent=5 // pred_region
      %s391 = ssub.s32 %s8, 2
      // Predicated region
      $region41: #{tpu_custom_call.1} parent=39 // pred_check
        %p392 = pneg %p113
      $region42: #{tpu_custom_call.1} parent=39 // pred_check_branch
        %394 = sbr.rel (%p392) target = $region44
      $region43: #{tpu_custom_call.1} parent=39 // pred_region
        %p395 = scmp.lt.s32.totalorder %s19, 1
        %s396 = scalar_select %p395, %s19, 1
        %s397 = scalar_lea.vmem %s2, %s396
      $region44: #{tpu_custom_call.1} parent=39 // pred_fallthru
        _
    $region40: #{tpu_custom_call.1} parent=5 // pred_fallthru
      _
  $region6: #{tpu_custom_call.1} parent=0 // loop_footer
    %s12 = sadd.s32 1, %s8
  $region7: #{tpu_custom_call.1} parent=0 // loop_footer_branch
    %7 = sbr.rel target = $region3
  $region8: #{tpu_custom_call.1} parent=0 // loop_exit
    _

</llo_original>
